<compile_context>
chip_gen: v7x
topology: tpu7x:2x2x1
jax: 0.10.0
libtpu: 0.0.40
codegen_flags: <defaults>
</compile_context>

<pallas_src>
import jax
import jax.numpy as jnp
from jax.experimental import pallas as pl
from jax.experimental.pallas import tpu as pltpu

_TARGET_BLOCK_BYTES = 4 * 1024 * 1024    # ~4 MiB per block; x4 (double-buffered
                                         # in + out) ~ 16 MiB footprint -> v7x-safe
_VMEM_LIMIT_BYTES = 32 * 1024 * 1024     # <= v6e/v7x scoped default, raises v5e's 16 MiB
_SPLIT_FOR_MEGACORE_BYTES = 2 * 1024 * 1024  # only force >=2 grid steps above this size


def _round_up(x: int, m: int) -> int:
    return (x + m - 1) // m * m


def _sublane_rows(dtype) -> int:
    """Native sublane tile height: 8 for 4-byte, 16 for 2-byte, 32 for 1-byte dtypes."""
    return max(8, 32 // jnp.dtype(dtype).itemsize)


def _identity_copy_kernel(src_ref, dst_ref):
    # forward(): return self.coeff_pred  -> straight VMEM copy of the tile.
    dst_ref[...] = src_ref[...]


@jax.jit
def coeff_pred_forward(coeff_pred: jax.Array) -> jax.Array:
    """Pallas equivalent of CoeffPredModel.forward(): returns coeff_pred."""
    n_frames, n_coeffs = coeff_pred.shape
    dtype = coeff_pred.dtype
    itemsize = jnp.dtype(dtype).itemsize
    sub = _sublane_rows(dtype)

    # Frame tile: multiple of the native sublane height, sized so one block is
    # ~4 MiB (no padding of the coefficient axis -- last dim is the full 70).
    row_bytes = max(n_coeffs * itemsize, 1)
    max_rows = max(sub, (_TARGET_BLOCK_BYTES // row_bytes) // sub * sub)
    tile_m = min(_round_up(n_frames, sub), max_rows)
    grid_m = pl.cdiv(n_frames, tile_m)

    # If everything fits in one block but the copy is big enough that splitting
    # pays off, use 2 steps so v7x's two TensorCores both move bytes.
    total_bytes = n_frames * row_bytes
    if grid_m == 1 and n_frames >= 2 * sub and total_bytes >= _SPLIT_FOR_MEGACORE_BYTES:
        tile_m = _round_up(pl.cdiv(n_frames, 2), sub)
        grid_m = pl.cdiv(n_frames, tile_m)

    # TODO(synk): the truly optimal faithful forward for the 8x70 use case is
    # `return coeff_pred` with no kernel; the Pallas copy is kept to exercise TPU.
    return pl.pallas_call(
        _identity_copy_kernel,
        out_shape=jax.ShapeDtypeStruct((n_frames, n_coeffs), dtype),
        grid=(grid_m,),
        in_specs=[pl.BlockSpec((tile_m, n_coeffs), lambda i: (i, 0))],
        out_specs=pl.BlockSpec((tile_m, n_coeffs), lambda i: (i, 0)),
        compiler_params=pltpu.CompilerParams(
            dimension_semantics=("parallel",),
            vmem_limit_bytes=_VMEM_LIMIT_BYTES,
        ),
    )(coeff_pred)


class CoeffPredModel:
    """Mirror of the PyTorch module: holds coeff_pred, forward returns it."""

    def __init__(self, coeff_pred: jax.Array):
        self.coeff_pred = coeff_pred

    def forward(self) -> jax.Array:
        return coeff_pred_forward(self.coeff_pred)


if __name__ == "__main__":
    # Deterministic synthetic coeff_pred: 8 frames x 70 3DMM coefficients.
    key = jax.random.PRNGKey(0)
    coeff_pred = jax.random.normal(key, (8, 70), dtype=jnp.float32)

    model = CoeffPredModel(coeff_pred)
    out = model.forward()
    out = jax.block_until_ready(out)

    assert out.shape == coeff_pred.shape
    assert out.dtype == coeff_pred.dtype
    assert bool(jnp.all(out == coeff_pred))
    print("KERNEL_OK")
</pallas_src>

<mosaic_0001>
module attributes {stable_mosaic.version = 11 : i64} {
  func.func @_identity_copy_kernel(%arg0: i32, %arg1: memref<8x70xf32, #tpu.memory_space<vmem>>, %arg2: memref<8x70xf32, #tpu.memory_space<vmem>>) attributes {dimension_semantics = [#tpu.dimension_semantics<parallel>], iteration_bounds = array<i64: 1>, scalar_prefetch = 0 : i64, scratch_operands = 0 : i64, tpu.core_type = #tpu.core_type<tc>, window_params = [{transform_indices = @transform_0, window_bounds = array<i64: 8, 70>}, {transform_indices = @transform_1, window_bounds = array<i64: 8, 70>}]} {
    %c0 = arith.constant 0 : index
    %c0_0 = arith.constant 0 : index
    %0 = vector.load %arg1[%c0, %c0_0] : memref<8x70xf32, #tpu.memory_space<vmem>>, vector<8x70xf32>
    %c0_1 = arith.constant 0 : index
    %c0_2 = arith.constant 0 : index
    %1 = vector.load %arg2[%c0_1, %c0_2] : memref<8x70xf32, #tpu.memory_space<vmem>>, vector<8x70xf32>
    tpu.vector_store %arg2[%c0_1, %c0_2], %0 {strides = array<i32>} : memref<8x70xf32, #tpu.memory_space<vmem>>, vector<8x70xf32>,
    return
  }
  func.func @transform_0(%arg0: i32) -> (i32, i32) {
    %c0_i32 = arith.constant 0 : i32
    %c0_i32_0 = arith.constant 0 : i32
    return %arg0, %c0_i32 : i32, i32
  }
  func.func @transform_1(%arg0: i32) -> (i32, i32) {
    %c0_i32 = arith.constant 0 : i32
    %c0_i32_0 = arith.constant 0 : i32
    return %arg0, %c0_i32 : i32, i32
  }
}

</mosaic_0001>

<llo_original>
// kernel: coeff_pred_forward.1
$region0: #{coeff_pred_forward.1}
  #allocation0 [shape = 'u32[]', space=smem, size = 0x4, offset = 0x4, fixed_abs, tag = 'smem constant byte address 0x4 - core index']
  #allocation1 [shape = 'u32[144,128]{1,0:T(1,128)}', space=vmem, size = 0x12000, scoped, tag = 'internal scratch']
  %s0 = inlined_call_operand.hbm [shape: f32[8,70], index: 0, kind: input, shape index: {}]
  %s1 = inlined_call_operand.hbm [shape: f32[8,70], index: 1, kind: output, shape index: {}]
  %s2 = sld [smem:[#allocation0]]
  $region18: #{coeff_pred_forward.1} parent=0
    _
  %s4 = ssub.s32 1, %s2
  %s5 = scalar_select 0, %s4, %s2
  $region1: #{coeff_pred_forward.1} parent=0
    #allocation2 [shape = 'u8[4096]{0}', space=vmem, size = 0x1000, scoped, tag = 'input window, operand 0, single buffered']
    #allocation3 [shape = 's32[1]{0}', space=sflag, size = 0x4, scoped, tag = 'scoped memory for coeff_pred_forward.1']
    #allocation4 [shape = 's32[1]{0}', space=sflag, size = 0x4, scoped, tag = 'scoped memory for coeff_pred_forward.1']
    #allocation5 [shape = 'u8[4096]{0}', space=vmem, size = 0x1000, scoped, tag = 'output window, operand 0, single buffered']
    %6 = vsyncpa [#allocation3], 0
    %7 = vsyncpa [#allocation4], 0
    // Predicated region
    $region2: #{coeff_pred_forward.1} parent=1 // pred_check
      _
    $region3: #{coeff_pred_forward.1} parent=1 // pred_check_branch
      %9 = sbr.rel (0) target = $region5
    $region4: #{coeff_pred_forward.1} parent=1 // pred_region
      %s11 = ssub.s32 128, 128
      %12 = vsyncadd [#allocation3], %s11
      %s14 = sshll.u32 [#allocation2], 4
      %s15 = int_to_ptr.vmem [resolvable:$true] %s14
      %17 = dma.hbm_to_vmem [thread:$0]  %s0, 128, %s15, [#allocation3]
    $region5: #{coeff_pred_forward.1} parent=1 // pred_fallthru
      _
    // Predicated region
    $region6: #{coeff_pred_forward.1} parent=1 // pred_check
      _
    $region7: #{coeff_pred_forward.1} parent=1 // pred_check_branch
      %19 = sbr.rel (0) target = $region9
    $region8: #{coeff_pred_forward.1} parent=1 // pred_region
      %20 = dma.done [#allocation3], 128
    $region9: #{coeff_pred_forward.1} parent=1 // pred_fallthru
      _
    %v21 = vld [vmem:[#allocation2] sm:$0xff]
    %vm22 = vcmask 572416
    %23 = vst.msk [vmem:[#allocation5] sm:$0xff] %vm22, %v21
    // Predicated region
    $region10: #{coeff_pred_forward.1} parent=1 // pred_check
      _
    $region11: #{coeff_pred_forward.1} parent=1 // pred_check_branch
      %25 = sbr.rel (0) target = $region13
    $region12: #{coeff_pred_forward.1} parent=1 // pred_region
      %s27 = ssub.s32 128, 128
      %28 = vsyncadd [#allocation4], %s27
      %s30 = sshll.u32 [#allocation5], 4
      %s31 = int_to_ptr.vmem [resolvable:$true] %s30
      %33 = dma.vmem_to_hbm [thread:$0]  %s31, 128, %s1, [#allocation4]
    $region13: #{coeff_pred_forward.1} parent=1 // pred_fallthru
      _
    // Predicated region
    $region14: #{coeff_pred_forward.1} parent=1 // pred_check
      _
    $region15: #{coeff_pred_forward.1} parent=1 // pred_check_branch
      %35 = sbr.rel (0) target = $region17
    $region16: #{coeff_pred_forward.1} parent=1 // pred_region
      %36 = dma.done [#allocation4], 128
    $region17: #{coeff_pred_forward.1} parent=1 // pred_fallthru
      _
    %37 = vsyncpa [#allocation3], 1
    %38 = vsyncpa [#allocation4], 1

</llo_original>
